<compile_context>
chip_gen: v7x
topology: tpu7x:2x2x1
jax: 0.10.0
libtpu: 0.0.40
codegen_flags: <defaults>
</compile_context>

<pallas_src>
import functools

import jax
import jax.numpy as jnp
from jax.experimental import pallas as pl
from jax.experimental.pallas import tpu as pltpu


def _distill_kl_kernel(*refs, inv_t, num_teachers, tile_rows, total_rows, mask_rows):
    ys_ref = refs[0]
    yt_refs = refs[1:1 + num_teachers]
    out_ref = refs[1 + num_teachers]

    row_valid = None
    if mask_rows:
        base = pl.program_id(0) * tile_rows
        rows = base + jax.lax.broadcasted_iota(jnp.int32, (tile_rows, 1), 0)
        row_valid = rows < total_rows                              # (TN, 1)

    # ---- Student: log_softmax(y_s * (1/T)) along classes (last axis). ----
    ys = ys_ref[...].astype(jnp.float32) * inv_t                   # (TN, C)
    if mask_rows:
        ys = jnp.where(row_valid, ys, 0.0)
    ys_shift = ys - jnp.max(ys, axis=-1, keepdims=True)
    log_p_s = ys_shift - jnp.log(jnp.sum(jnp.exp(ys_shift), axis=-1, keepdims=True))

    if num_teachers == 1:
        # Fast path: compute the teacher log-softmax directly (no log(softmax),
        # no zero-masking needed since p_t = exp(log_p_t) -> 0 * finite = 0).
        yt = yt_refs[0][...].astype(jnp.float32) * inv_t
        if mask_rows:
            yt = jnp.where(row_valid, yt, 0.0)
        yt_shift = yt - jnp.max(yt, axis=-1, keepdims=True)
        log_p_t = yt_shift - jnp.log(jnp.sum(jnp.exp(yt_shift), axis=-1, keepdims=True))
        p_t = jnp.exp(log_p_t)
        kl = p_t * (log_p_t - log_p_s)
    else:
        # Mean of teacher softmaxes, accumulated without materializing (K, TN, C).
        p_t = jnp.zeros(log_p_s.shape, jnp.float32)
        for t_ref in yt_refs:
            yt = t_ref[...].astype(jnp.float32) * inv_t
            if mask_rows:
                yt = jnp.where(row_valid, yt, 0.0)
            yt_exp = jnp.exp(yt - jnp.max(yt, axis=-1, keepdims=True))
            inv_denom = pl.reciprocal(jnp.sum(yt_exp, axis=-1, keepdims=True))
            p_t = p_t + yt_exp * inv_denom
        p_t = p_t * (1.0 / num_teachers)
        # Clamp before log: where p_t == 0 the product is exactly 0, matching
        # PyTorch kl_div's zero-target handling, without a jnp.where mask.
        log_p_t = jnp.log(jnp.maximum(p_t, jnp.float32(1e-38)))
        kl = p_t * (log_p_t - log_p_s)

    if mask_rows:
        kl_rows = jnp.sum(kl, axis=-1, keepdims=True)              # (TN, 1)
        partial = jnp.sum(jnp.where(row_valid, kl_rows, 0.0))
    else:
        partial = jnp.sum(kl)
    out_ref[0, 0] = partial


def _pick_tile_rows(n, c, num_teachers, itemsize):
    """Rows per tile: double-buffered inputs must fit comfortably in scoped VMEM
    on all generations (v7x has only 32 MiB scoped by default)."""
    budget = 8 * 1024 * 1024                         # conservative DMA-buffer budget
    per_row = 2 * (1 + num_teachers) * c * itemsize  # double-buffered bytes / row
    tn = budget // max(per_row, 1)
    tn = min(tn, n, 512)
    if tn >= n:
        return int(n)
    # Block second-last dim must be a multiple of 8 (or equal to the full dim).
    tn = max(8, (tn // 8) * 8)
    # TODO(synk): for vocab-scale C (>32K) add a class-chunk grid axis with an
    # online logsumexp so a single row-tile never has to hold the full class axis.
    return int(min(tn, n))


def distill_kl(y_s, y_t, T, *, tile_rows=None):
    """Pallas implementation of DistillKL.forward.

    y_s: (N, C) student logits. y_t: (N, C) teacher logits or a list of them.
    Inputs may be f32 or bf16; do NOT pre-cast (cast happens in-kernel).
    """
    teachers = list(y_t) if isinstance(y_t, (list, tuple)) else [y_t]
    k = len(teachers)
    n, c = y_s.shape

    itemsize = max(jnp.dtype(y_s.dtype).itemsize,
                   max(jnp.dtype(t.dtype).itemsize for t in teachers))
    tn = tile_rows if tile_rows is not None else _pick_tile_rows(n, c, k, itemsize)
    tn = int(min(tn, n))
    num_tiles = pl.cdiv(n, tn)
    mask_rows = (n % tn) != 0

    kernel = functools.partial(
        _distill_kl_kernel,
        inv_t=1.0 / float(T),
        num_teachers=k,
        tile_rows=tn,
        total_rows=n,
        mask_rows=mask_rows,
    )

    row_spec = pl.BlockSpec((tn, c), lambda i: (i, 0))
    cost = pl.CostEstimate(
        flops=int(8 * (1 + k) * n * c),
        transcendentals=int((1 + k) * n * c),
        bytes_accessed=int(sum(a.size * jnp.dtype(a.dtype).itemsize
                               for a in [y_s] + teachers) + 4 * int(num_tiles)),
    )

    partials = pl.pallas_call(
        kernel,
        out_shape=jax.ShapeDtypeStruct((int(num_tiles), 1), jnp.float32),
        grid=(num_tiles,),
        in_specs=[row_spec] * (1 + k),
        out_specs=pl.BlockSpec((1, 1), lambda i: (i, 0), memory_space=pltpu.SMEM),
        compiler_params=pltpu.CompilerParams(
            dimension_semantics=("parallel",),
            vmem_limit_bytes=32 * 1024 * 1024,
        ),
        cost_estimate=cost,
    )(y_s, *teachers)

    return jnp.sum(partials) * (float(T) ** 2) / float(n)


def _reference(y_s, y_t, T):
    log_p_s = jax.nn.log_softmax(y_s.astype(jnp.float32) / T, axis=1)
    if isinstance(y_t, (list, tuple)):
        p_t = jnp.mean(
            jnp.stack([jax.nn.softmax(y.astype(jnp.float32) / T, axis=1) for y in y_t]),
            axis=0,
        )
    else:
        p_t = jax.nn.softmax(y_t.astype(jnp.float32) / T, axis=1)
    kl = p_t * (jnp.log(p_t) - log_p_s)
    return jnp.sum(kl) * (T ** 2) / y_s.shape[0]


if __name__ == "__main__":
    key = jax.random.PRNGKey(0)
    k1, k2, k3, k4, k5 = jax.random.split(key, 5)
    T = 4.0

    # 1) Single-teacher path, small shapes, single tile.
    N, C = 4, 16
    y_s = jax.random.normal(k1, (N, C), dtype=jnp.float32)
    y_t_single = jax.random.normal(k2, (N, C), dtype=jnp.float32)
    loss = jax.block_until_ready(distill_kl(y_s, y_t_single, T))
    ref = _reference(y_s, y_t_single, T)
    assert jnp.allclose(loss, ref, rtol=1e-5, atol=1e-5), (loss, ref)

    # 2) List-of-teachers path (K = 2).
    y_t_list = [y_t_single, jax.random.normal(k3, (N, C), dtype=jnp.float32)]
    loss = jax.block_until_ready(distill_kl(y_s, y_t_list, T))
    ref = _reference(y_s, y_t_list, T)
    assert jnp.allclose(loss, ref, rtol=1e-5, atol=1e-5), (loss, ref)

    # 3) Multi-tile grid with a ragged last tile (exercises row masking + partials).
    N2, C2 = 20, 128
    y_s2 = jax.random.normal(k4, (N2, C2), dtype=jnp.float32)
    y_t2 = jax.random.normal(k5, (N2, C2), dtype=jnp.float32)
    loss = jax.block_until_ready(distill_kl(y_s2, y_t2, T, tile_rows=8))
    ref = _reference(y_s2, y_t2, T)
    assert jnp.allclose(loss, ref, rtol=1e-5, atol=1e-5), (loss, ref)

    # 4) bf16 logits stay bf16 in HBM; cast happens inside the kernel.
    y_s_bf = y_s2.astype(jnp.bfloat16)
    y_t_bf = y_t2.astype(jnp.bfloat16)
    loss = jax.block_until_ready(distill_kl(y_s_bf, y_t_bf, T, tile_rows=8))
    ref = _reference(y_s_bf, y_t_bf, T)
    assert jnp.allclose(loss, ref, rtol=1e-4, atol=1e-4), (loss, ref)

    print("KERNEL_OK")
</pallas_src>

<mosaic_0001>
module attributes {stable_mosaic.version = 11 : i64} {
  func.func @_distill_kl_kernel(%arg0: i32, %arg1: memref<4x16xf32, #tpu.memory_space<vmem>>, %arg2: memref<4x16xf32, #tpu.memory_space<vmem>>, %arg3: memref<1x1xf32, #tpu.memory_space<smem>>) attributes {dimension_semantics = [#tpu.dimension_semantics<parallel>], iteration_bounds = array<i64: 1>, scalar_prefetch = 0 : i64, scratch_operands = 0 : i64, tpu.core_type = #tpu.core_type<tc>, window_params = [{transform_indices = @transform_0, window_bounds = array<i64: 4, 16>}, {transform_indices = @transform_1, window_bounds = array<i64: 4, 16>}, {transform_indices = @transform_2, window_bounds = array<i64: 1, 1>}]} {
    %c0 = arith.constant 0 : index
    %c0_0 = arith.constant 0 : index
    %0 = vector.load %arg1[%c0, %c0_0] : memref<4x16xf32, #tpu.memory_space<vmem>>, vector<4x16xf32>
    %cst = arith.constant 2.500000e-01 : f32
    %1 = vector.broadcast %cst : f32 to vector<4x16xf32>
    %2 = arith.mulf %0, %1 : vector<4x16xf32>
    %cst_1 = arith.constant dense<0xFF800000> : vector<4xf32>
    %3 = vector.multi_reduction <maximumf>, %2, %cst_1 [1] : vector<4x16xf32> to vector<4xf32>
    %4 = vector.shape_cast %3 : vector<4xf32> to vector<4x1xf32>
    %5 = vector.broadcast %4 : vector<4x1xf32> to vector<4x16xf32>
    %6 = arith.subf %2, %5 : vector<4x16xf32>
    %7 = math.exp %6 : vector<4x16xf32>
    %cst_2 = arith.constant dense<0.000000e+00> : vector<4xf32>
    %8 = vector.multi_reduction <add>, %7, %cst_2 [1] : vector<4x16xf32> to vector<4xf32>
    %9 = vector.shape_cast %8 : vector<4xf32> to vector<4x1xf32>
    %10 = math.log %9 : vector<4x1xf32>
    %11 = vector.broadcast %10 : vector<4x1xf32> to vector<4x16xf32>
    %12 = arith.subf %6, %11 : vector<4x16xf32>
    %c0_3 = arith.constant 0 : index
    %c0_4 = arith.constant 0 : index
    %13 = vector.load %arg2[%c0_3, %c0_4] : memref<4x16xf32, #tpu.memory_space<vmem>>, vector<4x16xf32>
    %cst_5 = arith.constant 2.500000e-01 : f32
    %14 = vector.broadcast %cst_5 : f32 to vector<4x16xf32>
    %15 = arith.mulf %13, %14 : vector<4x16xf32>
    %cst_6 = arith.constant dense<0xFF800000> : vector<4xf32>
    %16 = vector.multi_reduction <maximumf>, %15, %cst_6 [1] : vector<4x16xf32> to vector<4xf32>
    %17 = vector.shape_cast %16 : vector<4xf32> to vector<4x1xf32>
    %18 = vector.broadcast %17 : vector<4x1xf32> to vector<4x16xf32>
    %19 = arith.subf %15, %18 : vector<4x16xf32>
    %20 = math.exp %19 : vector<4x16xf32>
    %cst_7 = arith.constant dense<0.000000e+00> : vector<4xf32>
    %21 = vector.multi_reduction <add>, %20, %cst_7 [1] : vector<4x16xf32> to vector<4xf32>
    %22 = vector.shape_cast %21 : vector<4xf32> to vector<4x1xf32>
    %23 = math.log %22 : vector<4x1xf32>
    %24 = vector.broadcast %23 : vector<4x1xf32> to vector<4x16xf32>
    %25 = arith.subf %19, %24 : vector<4x16xf32>
    %26 = math.exp %25 : vector<4x16xf32>
    %27 = arith.subf %25, %12 : vector<4x16xf32>
    %28 = arith.mulf %26, %27 : vector<4x16xf32>
    %29 = vector.shape_cast %28 : vector<4x16xf32> to vector<1x4x16xf32>
    %cst_8 = arith.constant dense<0.000000e+00> : vector<1xf32>
    %30 = vector.multi_reduction <add>, %29, %cst_8 [1, 2] : vector<1x4x16xf32> to vector<1xf32>
    %31 = vector.shape_cast %30 : vector<1xf32> to vector<1x1x1xf32>
    %32 = vector.extract %31[0, 0, 0] : f32 from vector<1x1x1xf32>
    %c0_9 = arith.constant 0 : index
    %c0_10 = arith.constant 0 : index
    %33 = memref.load %arg3[%c0_9, %c0_10] : memref<1x1xf32, #tpu.memory_space<smem>>
    memref.store %32, %arg3[%c0_9, %c0_10] : memref<1x1xf32, #tpu.memory_space<smem>>
    return
  }
  func.func @transform_0(%arg0: i32) -> (i32, i32) {
    %c0_i32 = arith.constant 0 : i32
    %c0_i32_0 = arith.constant 0 : i32
    return %arg0, %c0_i32 : i32, i32
  }
  func.func @transform_1(%arg0: i32) -> (i32, i32) {
    %c0_i32 = arith.constant 0 : i32
    %c0_i32_0 = arith.constant 0 : i32
    return %arg0, %c0_i32 : i32, i32
  }
  func.func @transform_2(%arg0: i32) -> (i32, i32) {
    %c0_i32 = arith.constant 0 : i32
    %c0_i32_0 = arith.constant 0 : i32
    return %arg0, %c0_i32 : i32, i32
  }
}

</mosaic_0001>

<llo_original>
// kernel: tpu_custom_call.1
$region0: #{tpu_custom_call.1}
  #allocation0 [shape = 'u32[]', space=smem, size = 0x4, offset = 0x4, fixed_abs, tag = 'smem constant byte address 0x4 - core index']
  #allocation1 [shape = 'u32[144,128]{1,0:T(1,128)}', space=vmem, size = 0x12000, scoped, tag = 'internal scratch']
  %s0 = inlined_call_operand.hbm [shape: f32[4,16], index: 0, kind: input, shape index: {}]
  %s1 = inlined_call_operand.hbm [shape: f32[4,16], index: 1, kind: input, shape index: {}]
  %s2 = inlined_call_operand.hbm [shape: f32[1,1], index: 2, kind: output, shape index: {}]
  %s3 = sld [smem:[#allocation0]]
  $region26: #{tpu_custom_call.1} parent=0
    _
  %s5 = ssub.s32 1, %s3
  %s6 = scalar_select 0, %s5, %s3
  $region1: #{tpu_custom_call.1} parent=0
    #allocation2 [shape = 'u8[2048]{0}', space=vmem, size = 0x800, scoped, tag = 'input window, operand 0, single buffered']
    #allocation3 [shape = 's32[1]{0}', space=sflag, size = 0x4, scoped, tag = 'scoped memory for tpu_custom_call.1']
    #allocation4 [shape = 's32[1]{0}', space=sflag, size = 0x4, scoped, tag = 'scoped memory for tpu_custom_call.1']
    #allocation5 [shape = 'u8[2048]{0}', space=vmem, size = 0x800, scoped, tag = 'input window, operand 1, single buffered']
    #allocation6 [shape = 's32[1]{0}', space=sflag, size = 0x4, scoped, tag = 'scoped memory for tpu_custom_call.1']
    #allocation7 [shape = 'u8[512]{0}', space=smem, size = 0x200, scoped, tag = 'output window, operand 0, single buffered']
    %7 = vsyncpa [#allocation3], 0
    %8 = vsyncpa [#allocation6], 0
    %9 = vsyncpa [#allocation4], 0
    // Predicated region
    $region2: #{tpu_custom_call.1} parent=1 // pred_check
      _
    $region3: #{tpu_custom_call.1} parent=1 // pred_check_branch
      %11 = sbr.rel (0) target = $region5
    $region4: #{tpu_custom_call.1} parent=1 // pred_region
      %s13 = ssub.s32 64, 64
      %14 = vsyncadd [#allocation3], %s13
      %s16 = sshll.u32 [#allocation2], 4
      %s17 = int_to_ptr.vmem [resolvable:$true] %s16
      %19 = dma.hbm_to_vmem [thread:$0]  %s0, 64, %s17, [#allocation3]
    $region5: #{tpu_custom_call.1} parent=1 // pred_fallthru
      _
    // Predicated region
    $region6: #{tpu_custom_call.1} parent=1 // pred_check
      _
    $region7: #{tpu_custom_call.1} parent=1 // pred_check_branch
      %21 = sbr.rel (0) target = $region9
    $region8: #{tpu_custom_call.1} parent=1 // pred_region
      %s23 = ssub.s32 64, 64
      %24 = vsyncadd [#allocation6], %s23
      %s26 = sshll.u32 [#allocation5], 4
      %s27 = int_to_ptr.vmem [resolvable:$true] %s26
      %29 = dma.hbm_to_vmem [thread:$0]  %s1, 64, %s27, [#allocation6]
    $region9: #{tpu_custom_call.1} parent=1 // pred_fallthru
      _
    // Predicated region
    $region10: #{tpu_custom_call.1} parent=1 // pred_check
      _
    $region11: #{tpu_custom_call.1} parent=1 // pred_check_branch
      %31 = sbr.rel (0) target = $region13
    $region12: #{tpu_custom_call.1} parent=1 // pred_region
      %32 = dma.done [#allocation3], 64
    $region13: #{tpu_custom_call.1} parent=1 // pred_fallthru
      _
    // Predicated region
    $region14: #{tpu_custom_call.1} parent=1 // pred_check
      _
    $region15: #{tpu_custom_call.1} parent=1 // pred_check_branch
      %34 = sbr.rel (0) target = $region17
    $region16: #{tpu_custom_call.1} parent=1 // pred_region
      %35 = dma.done [#allocation6], 64
    $region17: #{tpu_custom_call.1} parent=1 // pred_fallthru
      _
    %v36 = vld [vmem:[#allocation2] sm:$0xf]
    %v37 = vmul.f32 %v36, 0.25
    %vm38 = vcmask 125952
    %v39 = vsel %vm38, %v37, -inf
    %40 = vmax.xlane.f32.xlu0 %v39
    %v41 = vpop.xlane.xlu0 %40
    %v42 = vsub.f32 %v37, %v41
    %v43 = vmul.f32 %v42, 1.442695
    %v44 = vpow.pop %v43
    %v45 = vsel %vm38, %v44, 0.0
    %46 = vadd.xlane.f32.xlu0 %v45
    %v47 = vpop.xlane.xlu0 %46
    %v48 = vlog2.pop %v47
    %v49 = vmul.f32 %v48, 0.6931472
    %v50 = vsub.f32 %v42, %v49
    %v51 = vld [vmem:[#allocation5] sm:$0xf]
    %v52 = vmul.f32 %v51, 0.25
    %v53 = vsel %vm38, %v52, -inf
    %54 = vmax.xlane.f32.xlu0 %v53
    %v55 = vpop.xlane.xlu0 %54
    %v56 = vsub.f32 %v52, %v55
    %v57 = vmul.f32 %v56, 1.442695
    %v58 = vpow.pop %v57
    %v59 = vsel %vm38, %v58, 0.0
    %60 = vadd.xlane.f32.xlu0 %v59
    %v61 = vpop.xlane.xlu0 %60
    %v62 = vlog2.pop %v61
    %v63 = vmul.f32 %v62, 0.6931472
    %v64 = vsub.f32 %v56, %v63
    %v65 = vmul.f32 %v64, 1.442695
    %v66 = vpow.pop %v65
    %v67 = vsub.f32 %v64, %v50
    %v68 = vmul.f32 %v66, %v67
    %v69 = vsel %vm38, %v68, 0.0
    %70 = vadd.xlane.f32.xlu0 %v69
    %v71 = vpop.xlane.xlu0 %70
    %v72 = vrot.slane %v71, 4
    %v73 = vadd.f32 %v71, %v72
    %v74 = vrot.slane %v73, 2
    %v75 = vadd.f32 %v73, %v74
    %v76 = vrot.slane %v75, 1
    %v77 = vadd.f32 %v75, %v76
    %s78 = vtos %v77
    %s79 = scalar_lea.smem [#allocation7], 0
    %80 = sst [smem:[%s79]] %s78
    // Predicated region
    $region18: #{tpu_custom_call.1} parent=1 // pred_check
      _
    $region19: #{tpu_custom_call.1} parent=1 // pred_check_branch
      %82 = sbr.rel (0) target = $region21
    $region20: #{tpu_custom_call.1} parent=1 // pred_region
      %s84 = ssub.s32 16, 16
      %85 = vsyncadd [#allocation4], %s84
      %88 = dma.smem_to_hbm [#allocation7], 16, %s2, [#allocation4]
    $region21: #{tpu_custom_call.1} parent=1 // pred_fallthru
      _
    // Predicated region
    $region22: #{tpu_custom_call.1} parent=1 // pred_check
      _
    $region23: #{tpu_custom_call.1} parent=1 // pred_check_branch
      %90 = sbr.rel (0) target = $region25
    $region24: #{tpu_custom_call.1} parent=1 // pred_region
      %91 = dma.done [#allocation4], 16
    $region25: #{tpu_custom_call.1} parent=1 // pred_fallthru
      _
    %92 = sfence
    %93 = vsyncpa [#allocation3], 1
    %94 = vsyncpa [#allocation6], 1
    %95 = vsyncpa [#allocation4], 1

</llo_original>
